<compile_context>
chip_gen: v5e
topology: v5e:2x2
jax: 0.10.0
libtpu: 0.0.40
codegen_flags: <defaults>
</compile_context>

<pallas_src>
import jax
import jax.numpy as jnp
from jax import lax
from jax.experimental import pallas as pl
from jax.experimental.pallas import tpu as pltpu


def _round_up(x: int, m: int) -> int:
    return ((x + m - 1) // m) * m


def dma_gather_kernel(idx_ref, table_hbm, out_ref, sem):
    """idx_ref: SMEM (n_pad,) int32 (scalar prefetch); table_hbm: HBM (V, D) ref;
    out_ref: VMEM (block_b, D) output block; sem: (1,) DMA semaphore shared by all row copies."""
    i = pl.program_id(0)
    block_b = out_ref.shape[0]
    base = i * block_b

    def issue(r, carry):
        row = idx_ref[base + r]
        pltpu.make_async_copy(table_hbm.at[row], out_ref.at[r], sem.at[0]).start()
        return carry

    lax.fori_loop(0, block_b, issue, 0)

    def drain(r, carry):
        # Every copy moves the same number of bytes, so waiting block_b times on the shared
        # semaphore drains exactly the block_b completions issued above.
        pltpu.make_async_copy(table_hbm.at[0], out_ref.at[r], sem.at[0]).wait()
        return carry

    lax.fori_loop(0, block_b, drain, 0)


def embedding_gather(indices, table):
    """out[..., :] = table[indices[...], :] via an SMEM-index-driven HBM DMA gather."""
    indices = jnp.asarray(indices)
    lead_shape = indices.shape
    flat_idx = indices.reshape(-1).astype(jnp.int32)
    vocab, dim = table.shape

    # No runtime bounds check on TPU dynamic addressing -> clamp untrusted indices.
    flat_idx = jnp.clip(flat_idx, 0, vocab - 1)

    n = flat_idx.shape[0]
    n8 = _round_up(max(n, 1), 8)            # f32 sublane multiple for the output block
    block_b = min(256, n8)
    # v7x megacore: prefer >= 2 batch tiles so the "parallel" axis shards across both TCs.
    if n8 == block_b and block_b >= 16:
        block_b = _round_up(block_b // 2, 8)
    n_pad = _round_up(n, block_b)

    if n_pad != n:
        flat_idx = jnp.pad(flat_idx, (0, n_pad - n))   # padded rows gather row 0; sliced off below

    grid = (n_pad // block_b,)
    itemsize = jnp.dtype(table.dtype).itemsize
    cost = pl.CostEstimate(
        flops=0,
        transcendentals=0,
        bytes_accessed=2 * n_pad * dim * itemsize + n_pad * 4,  # rows read + output + indices
    )

    out = pl.pallas_call(
        dma_gather_kernel,
        out_shape=jax.ShapeDtypeStruct((n_pad, dim), table.dtype),
        grid_spec=pltpu.PrefetchScalarGridSpec(
            num_scalar_prefetch=1,                      # flat_idx -> SMEM, passed to index_maps
            grid=grid,
            in_specs=[pl.BlockSpec(memory_space=pl.ANY)],   # table stays in HBM; manual DMA gather
            out_specs=pl.BlockSpec((block_b, dim), lambda i, idx: (i, 0)),
            scratch_shapes=[pltpu.SemaphoreType.DMA((1,))],
        ),
        compiler_params=pltpu.CompilerParams(
            dimension_semantics=("parallel",)),
        cost_estimate=cost,
    )(flat_idx, table)

    return out[:n].reshape(*lead_shape, dim)


def skipgram_forward(center_indices, in_embed_weight):
    """Pallas equivalent of SkipGram.forward / forward_input_embed: (B,) -> (B, D)."""
    return embedding_gather(center_indices, in_embed_weight)


def skipgram_forward_output_embeds(indices, out_embed_weight):
    """Pallas equivalent of SkipGram.forward_output_embeds: (B,) or (B, k) -> (..., D)."""
    return embedding_gather(indices, out_embed_weight)


def make_skipgram_params(key, vocab_size, embedding_dim, dtype=jnp.float32):
    """Deterministic init matching nn.Embedding + uniform_(-0.5/D, 0.5/D)."""
    init_range = 0.5 / embedding_dim
    k_in, k_out = jax.random.split(key)
    in_embed = jax.random.uniform(
        k_in, (vocab_size, embedding_dim), dtype=dtype,
        minval=-init_range, maxval=init_range)
    out_embed = jax.random.uniform(
        k_out, (vocab_size, embedding_dim), dtype=dtype,
        minval=-init_range, maxval=init_range)
    return in_embed, out_embed


if __name__ == "__main__":
    vocab_size = 256
    embedding_dim = 128
    batch = 8
    num_neg = 4

    key = jax.random.PRNGKey(0)
    k_params, k_idx, k_neg = jax.random.split(key, 3)

    in_embed_w, out_embed_w = make_skipgram_params(k_params, vocab_size, embedding_dim)
    center_indices = jax.random.randint(k_idx, (batch,), 0, vocab_size, dtype=jnp.int32)
    negative_indices = jax.random.randint(k_neg, (batch, num_neg), 0, vocab_size, dtype=jnp.int32)

    # forward (= forward_input_embed)
    out = skipgram_forward(center_indices, in_embed_w)
    out = jax.block_until_ready(out)
    ref = in_embed_w[center_indices]
    assert out.shape == (batch, embedding_dim)
    assert jnp.allclose(out, ref, atol=1e-6, rtol=1e-5), "forward mismatch vs reference gather"

    # forward_output_embeds on (B, k) negative samples (same kernel, flattened indices;
    # n=32 -> two batch tiles, exercising the parallel/megacore grid path)
    neg_emb = skipgram_forward_output_embeds(negative_indices, out_embed_w)
    neg_emb = jax.block_until_ready(neg_emb)
    neg_ref = out_embed_w[negative_indices]
    assert neg_emb.shape == (batch, num_neg, embedding_dim)
    assert jnp.allclose(neg_emb, neg_ref, atol=1e-6, rtol=1e-5), "output-embed mismatch"

    print("KERNEL_OK")
</pallas_src>

<mosaic_0001>
module attributes {stable_mosaic.version = 11 : i64} {
  func.func @dma_gather_kernel(%arg0: i32, %arg1: memref<8xi32, #tpu.memory_space<smem>>, %arg2: memref<256x128xf32, #tpu.memory_space<any>>, %arg3: memref<8x128xf32, #tpu.memory_space<vmem>>, %arg4: memref<1x!tpu.dma_semaphore, #tpu.memory_space<semaphore_mem>>) attributes {dimension_semantics = [#tpu.dimension_semantics<parallel>], iteration_bounds = array<i64: 1>, scalar_prefetch = 1 : i64, scratch_operands = 1 : i64, tpu.core_type = #tpu.core_type<tc>, window_params = [{}, {transform_indices = @transform_1, window_bounds = array<i64: 8, 128>}]} {
    %c8_i32 = arith.constant 8 : i32
    %0 = arith.muli %arg0, %c8_i32 : i32
    %c0_i32 = arith.constant 0 : i32
    %c8_i32_0 = arith.constant 8 : i32
    %1 = arith.addi %c0_i32, %c8_i32_0 : i32
    %c1_i32 = arith.constant 1 : i32
    scf.for %arg5 = %c0_i32 to %1 step %c1_i32  : i32 {
      %3 = arith.addi %0, %arg5 : i32
      %4 = arith.index_cast %3 : i32 to index
      %5 = memref.load %arg1[%4] : memref<8xi32, #tpu.memory_space<smem>>
      %c0_i32_6 = arith.constant 0 : i32
      %c0_i32_7 = arith.constant 0 : i32
      %6 = tpu.memref_slice %arg2[%5, %c0_i32_7] : memref<256x128xf32, #tpu.memory_space<any>> -> memref<1x128xf32, #tpu.memory_space<any>>
      %7 = tpu.memref_squeeze %6 : memref<1x128xf32, #tpu.memory_space<any>> -> memref<128xf32, #tpu.memory_space<any>>
      %c0_i32_8 = arith.constant 0 : i32
      %8 = tpu.memref_slice %arg3[%arg5, %c0_i32_8] : memref<8x128xf32, #tpu.memory_space<vmem>> -> memref<1x128xf32, #tpu.memory_space<vmem>>
      %9 = tpu.memref_squeeze %8 : memref<1x128xf32, #tpu.memory_space<vmem>> -> memref<128xf32, #tpu.memory_space<vmem>>
      %10 = tpu.memref_slice %arg4[%c0_i32_6] : memref<1x!tpu.dma_semaphore, #tpu.memory_space<semaphore_mem>> -> memref<1x!tpu.dma_semaphore, #tpu.memory_space<semaphore_mem>>
      %11 = tpu.memref_squeeze %10 : memref<1x!tpu.dma_semaphore, #tpu.memory_space<semaphore_mem>> -> memref<!tpu.dma_semaphore, #tpu.memory_space<semaphore_mem>>
      tpu.enqueue_dma source(%7 : memref<128xf32, #tpu.memory_space<any>>) target(%9 : memref<128xf32, #tpu.memory_space<vmem>>) target_semaphore(%11 : memref<!tpu.dma_semaphore, #tpu.memory_space<semaphore_mem>>)
    }
    %c8_i32_1 = arith.constant 8 : i32
    %c0_i32_2 = arith.constant 0 : i32
    %c8_i32_3 = arith.constant 8 : i32
    %2 = arith.addi %c0_i32_2, %c8_i32_3 : i32
    %c1_i32_4 = arith.constant 1 : i32
    scf.for %arg5 = %c0_i32_2 to %2 step %c1_i32_4  : i32 {
      %c0_i32_6 = arith.constant 0 : i32
      %c0_i32_7 = arith.constant 0 : i32
      %c0_i32_8 = arith.constant 0 : i32
      %3 = tpu.memref_slice %arg2[%c0_i32_6, %c0_i32_8] : memref<256x128xf32, #tpu.memory_space<any>> -> memref<1x128xf32, #tpu.memory_space<any>>
      %4 = tpu.memref_squeeze %3 : memref<1x128xf32, #tpu.memory_space<any>> -> memref<128xf32, #tpu.memory_space<any>>
      %c0_i32_9 = arith.constant 0 : i32
      %5 = tpu.memref_slice %arg3[%arg5, %c0_i32_9] : memref<8x128xf32, #tpu.memory_space<vmem>> -> memref<1x128xf32, #tpu.memory_space<vmem>>
      %6 = tpu.memref_squeeze %5 : memref<1x128xf32, #tpu.memory_space<vmem>> -> memref<128xf32, #tpu.memory_space<vmem>>
      %7 = tpu.memref_slice %arg4[%c0_i32_7] : memref<1x!tpu.dma_semaphore, #tpu.memory_space<semaphore_mem>> -> memref<1x!tpu.dma_semaphore, #tpu.memory_space<semaphore_mem>>
      %8 = tpu.memref_squeeze %7 : memref<1x!tpu.dma_semaphore, #tpu.memory_space<semaphore_mem>> -> memref<!tpu.dma_semaphore, #tpu.memory_space<semaphore_mem>>
      tpu.wait_dma2 semaphore(%8 : memref<!tpu.dma_semaphore, #tpu.memory_space<semaphore_mem>>) src(%4 : memref<128xf32, #tpu.memory_space<any>>) dst(%6 : memref<128xf32, #tpu.memory_space<vmem>>)
    }
    %c8_i32_5 = arith.constant 8 : i32
    return
  }
  func.func @transform_1(%arg0: i32, %arg1: memref<8xi32, #tpu.memory_space<smem>>) -> (i32, i32) {
    %c0_i32 = arith.constant 0 : i32
    %c0_i32_0 = arith.constant 0 : i32
    return %arg0, %c0_i32 : i32, i32
  }
}

</mosaic_0001>

<llo_original>
// kernel: tpu_custom_call.1
$region0: #{tpu_custom_call.1}
  #allocation0 [shape = 'u32[]', space=smem, size = 0x4, offset = 0x4, fixed_abs, tag = 'smem constant byte address 0x4 - core index']
  #allocation1 [shape = 'u32[72,128]{1,0:T(1,128)}', space=vmem, size = 0x9000, scoped, tag = 'internal scratch']
  #allocation2 [shape = 's32[1]{0}', space=sflag, size = 0x4, scoped, tag = 'scratch operand']
  #allocation3 [shape = 's32[1]{0}', space=sflag, size = 0x4, scoped, tag = 'scoped memory for tpu_custom_call.1']
  #allocation4 [shape = 'u8[512]{0}', space=smem, size = 0x200, scoped, tag = 'prefetched SMEM operand 0']
  #allocation7 [shape = 's32[]', space=sflag, size = 0x4, offset = 0, fixed_abs, tag = 'sflag constant byte address 0x0 - dummy sync flag']
  #allocation8 [shape = 's32[]', space=sflag, size = 0x4, offset = 0, fixed_abs, tag = 'sflag constant byte address 0x0 - dummy sync flag']
  #allocation9 [shape = 'u32[]', space=smem, size = 0x4, offset = 0x44, fixed_abs, tag = 'smem constant byte address 0x44 - assertion arg 0']
  #allocation10 [shape = 'u32[]', space=smem, size = 0x4, offset = 0x48, fixed_abs, tag = 'smem constant byte address 0x48 - assertion arg 1']
  %s0 = inlined_call_operand.hbm [shape: s32[8], index: 0, kind: input, shape index: {}]
  %s1 = inlined_call_operand.hbm [shape: f32[256,128], index: 1, kind: input, shape index: {}]
  %s2 = inlined_call_operand.hbm [shape: f32[8,128], index: 2, kind: output, shape index: {}]
  %s3 = sld [smem:[#allocation0]]
  $region28: #{tpu_custom_call.1} parent=0
    _
  %s5 = ssub.s32 1, %s3
  %s6 = scalar_select 0, %s5, %s3
  %s8 = sshll.u32 %s0, 4
  %s9 = int_to_ptr.hbm [resolvable:$true] %s8
  %11 = dma.hbm_to_smem %s9, 16, [#allocation4], [#allocation3]
  %13 = dma.done [#allocation3], 16
  %14 = sfence
  $region1: #{tpu_custom_call.1} parent=0
    #allocation5 [shape = 'u8[4096]{0}', space=vmem, size = 0x1000, scoped, tag = 'output window, operand 0, single buffered']
    #allocation6 [shape = 's32[1]{0}', space=sflag, size = 0x4, scoped, tag = 'scoped memory for tpu_custom_call.1']
    %15 = vsyncpa [#allocation6], 0
    %s16 = smul.u32 0, 8
    loop: start=0, step=1, limit=8
    $region2: #{tpu_custom_call.1} parent=1 // loop_pre_header
      _
    $region3: #{tpu_custom_call.1} parent=1 // loop_header
      %s18 = sphi 0, %s22
      %p19 = scmp.ge.s32.totalorder %s18, 8
    $region4: #{tpu_custom_call.1} parent=1 // loop_header_branch
      %21 = sbr.rel (%p19) target = $region8
    $region5: #{tpu_custom_call.1} parent=1 // loop_body
      %s23 = sadd.s32 %s16, %s18
      %s24 = sld [smem:[#allocation4 + %s23]]
      %s25 = scalar_lea.hbm %s1, %s24
      %s26 = scalar_lea.vmem [#allocation5], %s18
      // Predicated region
      $region9: #{tpu_custom_call.1} parent=5 // pred_check
        _
      $region10: #{tpu_custom_call.1} parent=5 // pred_check_branch
        %28 = sbr.rel target = $region12
      $region11: #{tpu_custom_call.1} parent=5 // pred_region
        %29 = sst [smem:[#allocation9]] [#allocation8]
        %30 = sst [smem:[#allocation10]] [#allocation7]
      $region12: #{tpu_custom_call.1} parent=5 // pred_fallthru
        _
      %32 = shalt.err (0)
      %s34 = sshll.u32 %s25, 4
      %s35 = int_to_ptr.hbm [resolvable:$true] %s34
      %s36 = sshll.u32 %s26, 4
      %s37 = int_to_ptr.vmem [resolvable:$true] %s36
      %39 = dma.hbm_to_vmem [thread:$0]  %s35, 16, %s37, [#allocation2]
    $region6: #{tpu_custom_call.1} parent=1 // loop_footer
      %s22 = sadd.s32 1, %s18
    $region7: #{tpu_custom_call.1} parent=1 // loop_footer_branch
      %17 = sbr.rel target = $region3
    $region8: #{tpu_custom_call.1} parent=1 // loop_exit
      _
    loop: start=0, step=1, limit=8
    $region13: #{tpu_custom_call.1} parent=1 // loop_pre_header
      _
    $region14: #{tpu_custom_call.1} parent=1 // loop_header
      %s41 = sphi 0, %s45
      %p42 = scmp.ge.s32.totalorder %s41, 8
    $region15: #{tpu_custom_call.1} parent=1 // loop_header_branch
      %44 = sbr.rel (%p42) target = $region19
    $region16: #{tpu_custom_call.1} parent=1 // loop_body
      %47 = dma.done [#allocation2], 16
    $region17: #{tpu_custom_call.1} parent=1 // loop_footer
      %s45 = sadd.s32 1, %s41
    $region18: #{tpu_custom_call.1} parent=1 // loop_footer_branch
      %40 = sbr.rel target = $region14
    $region19: #{tpu_custom_call.1} parent=1 // loop_exit
      _
    // Predicated region
    $region20: #{tpu_custom_call.1} parent=1 // pred_check
      _
    $region21: #{tpu_custom_call.1} parent=1 // pred_check_branch
      %49 = sbr.rel (0) target = $region23
    $region22: #{tpu_custom_call.1} parent=1 // pred_region
      %51 = vsyncadd [#allocation6], 0
      %s53 = sshll.u32 [#allocation5], 4
      %s54 = int_to_ptr.vmem [resolvable:$true] %s53
      %s55 = sshll.u32 %s2, 4
      %s56 = int_to_ptr.hbm [resolvable:$true] %s55
      %58 = dma.vmem_to_hbm [thread:$0]  %s54, 128, %s56, [#allocation6]
    $region23: #{tpu_custom_call.1} parent=1 // pred_fallthru
      _
    // Predicated region
    $region24: #{tpu_custom_call.1} parent=1 // pred_check
      _
    $region25: #{tpu_custom_call.1} parent=1 // pred_check_branch
      %60 = sbr.rel (0) target = $region27
    $region26: #{tpu_custom_call.1} parent=1 // pred_region
      %62 = dma.done [#allocation6], 128
    $region27: #{tpu_custom_call.1} parent=1 // pred_fallthru
      _
    %63 = vsyncpa [#allocation6], 1
  %64 = vsyncmov [#allocation2]
  %s65 = vpop.sfrf %64
  %p66 = scmp.eq.s32.totalorder %s65, 0
  %p67 = pneg %p66
  %69 = shalt.err (%p67)

</llo_original>
